<compile_context>
chip_gen: v5e
topology: v5e:2x2
jax: 0.10.0
libtpu: 0.0.40
codegen_flags: <defaults>
</compile_context>

<pallas_src>
import jax
import jax.numpy as jnp
from jax.experimental import pallas as pl
from jax.experimental.pallas import tpu as pltpu


# ---------------------------------------------------------------------------
# in-kernel math helpers (f32)
# ---------------------------------------------------------------------------
_SQRT_HALF = 0.7071067811865476


def _erf_f32(x):
    # Abramowitz & Stegun 7.1.26 polynomial, |err| < ~1.5e-7 in f32 (plus the
    # tiny approx-reciprocal error); only uses mul/exp/recip which always lower
    # on Mosaic.  The divide runs on the EUP via pl.reciprocal(approx=True).
    sign = jnp.where(x >= 0.0, 1.0, -1.0)
    a = jnp.abs(x)
    t = pl.reciprocal(1.0 + 0.3275911 * a, approx=True)
    poly = t * (0.254829592 + t * (-0.284496736 + t * (1.421413741 +
           t * (-1.453152027 + t * 1.061405429))))
    return sign * (1.0 - poly * jnp.exp(-a * a))


def _gelu_f32(x):
    # exact (erf-based) GELU, matching torch.nn.GELU() default
    return 0.5 * x * (1.0 + _erf_f32(x * _SQRT_HALF))


# ---------------------------------------------------------------------------
# kernels
# ---------------------------------------------------------------------------
def _mlp_kernel_resident(x_ref, w1_ref, b1_ref, w2_ref, b2_ref, o_ref):
    # One row tile per grid step; both weight matrices resident in VMEM.
    h = jnp.dot(x_ref[...], w1_ref[...], preferred_element_type=jnp.float32)
    h = _gelu_f32(h + b1_ref[...].astype(jnp.float32))
    y = jnp.dot(h.astype(w2_ref.dtype), w2_ref[...],
                preferred_element_type=jnp.float32)
    o_ref[...] = (y + b2_ref[...].astype(jnp.float32)).astype(o_ref.dtype)


def _mlp_kernel_htiled(x_ref, w1_ref, b1_ref, w2_ref, b2_ref, o_ref, acc_ref):
    # Hidden dim streamed over grid axis 1 ("arbitrary"); fc2 accumulated in
    # an f32 scratch, finalized (+ bias, cast) on the last hidden tile.
    j = pl.program_id(1)

    @pl.when(j == 0)
    def _():
        acc_ref[...] = jnp.zeros_like(acc_ref)

    h = jnp.dot(x_ref[...], w1_ref[...], preferred_element_type=jnp.float32)
    h = _gelu_f32(h + b1_ref[...].astype(jnp.float32))
    acc_ref[...] += jnp.dot(h.astype(w2_ref.dtype), w2_ref[...],
                            preferred_element_type=jnp.float32)

    @pl.when(j == pl.num_programs(1) - 1)
    def _():
        o_ref[...] = (acc_ref[...]
                      + b2_ref[...].astype(jnp.float32)).astype(o_ref.dtype)


# ---------------------------------------------------------------------------
# wrapper
# ---------------------------------------------------------------------------
def _round_up(n, m):
    return ((n + m - 1) // m) * m


def _vmem_capacity_bytes():
    try:
        return int(pltpu.get_tpu_info().vmem_capacity_bytes)
    except Exception:
        return 64 * 1024 * 1024  # conservative (v7x per-TensorCore)


def make_mlp_forward(w1, b1, w2, b2, *, param_dtype=None, block_h=None,
                     block_m=None, out_dtype=None,
                     weight_vmem_budget=24 * 1024 * 1024):
    """Build a fused Mlp forward:  y = fc2(GELU(fc1(x))).

    Weights are stored (in, out) (i.e. torch ``weight.T``); biases are (out,).
    Parameters are padded / cast ONCE here (not per call).  Dropout(p=0.0) is
    the identity and therefore omitted.
    """
    in_f, hid = w1.shape
    hid2, out_f = w2.shape
    assert hid2 == hid and b1.shape == (hid,) and b2.shape == (out_f,)

    p_dtype = jnp.dtype(param_dtype) if param_dtype is not None else jnp.dtype(w1.dtype)
    itemsize = p_dtype.itemsize

    # Lane-dense feature padding (exact: zero weight rows/cols + zero bias
    # contribute nothing, GELU(0) = 0, padded output columns are sliced off).
    Kp = _round_up(in_f, 128)
    Np = _round_up(out_f, 128)
    Hp = _round_up(hid, 128)

    # Hidden tile: keep all weights resident if they fit the budget, otherwise
    # stream (Kp, th) / (th, Np) weight tiles over a second grid axis.
    if block_h is None:
        if (Kp + Np) * Hp * itemsize <= weight_vmem_budget:
            block_h = Hp
        else:
            block_h = max(128, (weight_vmem_budget // (itemsize * (Kp + Np)))
                          // 128 * 128)
    block_h = min(_round_up(block_h, 128), Hp)
    Hp = _round_up(Hp, block_h)
    n_h = Hp // block_h

    w1p = jnp.pad(jnp.asarray(w1, p_dtype), ((0, Kp - in_f), (0, Hp - hid)))
    b1p = jnp.pad(jnp.asarray(b1, p_dtype).reshape(1, -1), ((0, 0), (0, Hp - hid)))
    w2p = jnp.pad(jnp.asarray(w2, p_dtype), ((0, Hp - hid), (0, Np - out_f)))
    b2p = jnp.pad(jnp.asarray(b2, p_dtype).reshape(1, -1), ((0, 0), (0, Np - out_f)))

    vmem_cap = _vmem_capacity_bytes()

    def forward(x):
        assert x.shape[-1] == in_f
        lead = x.shape[:-1]
        o_dtype = jnp.dtype(out_dtype) if out_dtype is not None else x.dtype

        x2 = x.reshape(-1, in_f)
        if x2.dtype != p_dtype:
            x2 = x2.astype(p_dtype)
        M = x2.shape[0]

        # Row tiling: tiles are multiples of 8 (sublane); force >= 2 tiles
        # whenever M allows so the "parallel" axis can shard across v7x's two
        # TensorCores; default tile adapts to VMEM capacity.
        bm = block_m
        if bm is None:
            bm = 512 if vmem_cap >= 96 * 1024 * 1024 else 256
        M8 = _round_up(max(M, 8), 8)
        n_row = max(1, pl.cdiv(M8, bm))
        if n_row == 1 and M8 >= 16:
            n_row = 2
        tm = _round_up(pl.cdiv(M8, n_row), 8)
        Mp = tm * n_row

        if (Mp, Kp) != (M, in_f):
            x2 = jnp.pad(x2, ((0, Mp - M), (0, Kp - in_f)))

        # Explicit VMEM budget (worst case: everything double buffered).
        est = (2 * (Kp * block_h + block_h * Np + block_h + Np) * itemsize
               + 2 * tm * Kp * itemsize
               + 2 * tm * Np * o_dtype.itemsize
               + tm * block_h * 4            # f32 hidden activation
               + tm * Np * 4)                # f32 accumulator
        vmem_limit = int(min(max(2 * est, 32 * 1024 * 1024),
                             int(0.9 * vmem_cap)))

        # Constant-index_map operands don't need double buffering.
        resident = pl.Buffered(buffer_count=1)

        if n_h == 1:
            out = pl.pallas_call(
                _mlp_kernel_resident,
                out_shape=jax.ShapeDtypeStruct((Mp, Np), o_dtype),
                grid=(n_row,),
                in_specs=[
                    pl.BlockSpec((tm, Kp), lambda i: (i, 0)),      # x row tile
                    pl.BlockSpec((Kp, Hp), lambda i: (0, 0),       # w1 resident
                                 pipeline_mode=resident),
                    pl.BlockSpec((1, Hp), lambda i: (0, 0),        # b1
                                 pipeline_mode=resident),
                    pl.BlockSpec((Hp, Np), lambda i: (0, 0),       # w2 resident
                                 pipeline_mode=resident),
                    pl.BlockSpec((1, Np), lambda i: (0, 0),        # b2
                                 pipeline_mode=resident),
                ],
                out_specs=pl.BlockSpec((tm, Np), lambda i: (i, 0)),
                compiler_params=pltpu.CompilerParams(
                    dimension_semantics=("parallel",),
                    vmem_limit_bytes=vmem_limit),
            )(x2, w1p, b1p, w2p, b2p)
        else:
            out = pl.pallas_call(
                _mlp_kernel_htiled,
                out_shape=jax.ShapeDtypeStruct((Mp, Np), o_dtype),
                grid=(n_row, n_h),
                in_specs=[
                    # x block index is constant over j -> fetched once per row tile
                    pl.BlockSpec((tm, Kp), lambda i, j: (i, 0)),
                    pl.BlockSpec((Kp, block_h), lambda i, j: (0, j)),   # w1 tile
                    pl.BlockSpec((1, block_h), lambda i, j: (0, j)),    # b1 tile
                    pl.BlockSpec((block_h, Np), lambda i, j: (j, 0)),   # w2 tile
                    pl.BlockSpec((1, Np), lambda i, j: (0, 0),          # b2
                                 pipeline_mode=resident),
                ],
                out_specs=pl.BlockSpec((tm, Np), lambda i, j: (i, 0)),
                scratch_shapes=[pltpu.VMEM((tm, Np), jnp.float32)],
                compiler_params=pltpu.CompilerParams(
                    dimension_semantics=("parallel", "arbitrary"),
                    vmem_limit_bytes=vmem_limit),
            )(x2, w1p, b1p, w2p, b2p)

        return out[:M, :out_f].reshape(*lead, out_f)

    return forward


# ---------------------------------------------------------------------------
# demo / self-check
# ---------------------------------------------------------------------------
if __name__ == "__main__":
    key = jax.random.PRNGKey(0)
    k_x, k_w1, k_b1, k_w2, k_b2 = jax.random.split(key, 5)

    # ViP-style Mlp: in_features = 56 (embed dim), hidden = 3 * 56 = 168,
    # tokens = 7*7 = 49, batch = 2.
    B, N = 2, 49
    IN_F, HID_F, OUT_F = 56, 168, 56

    x = jax.random.normal(k_x, (B, N, IN_F), jnp.float32)

    # torch.nn.Linear default init: uniform(+-1/sqrt(fan_in))
    bound1 = 1.0 / (IN_F ** 0.5)
    w1 = jax.random.uniform(k_w1, (IN_F, HID_F), jnp.float32, -bound1, bound1)
    b1 = jax.random.uniform(k_b1, (HID_F,), jnp.float32, -bound1, bound1)
    bound2 = 1.0 / (HID_F ** 0.5)
    w2 = jax.random.uniform(k_w2, (HID_F, OUT_F), jnp.float32, -bound2, bound2)
    b2 = jax.random.uniform(k_b2, (OUT_F,), jnp.float32, -bound2, bound2)

    # pure-JAX reference (exact erf GELU, matching torch.nn.GELU() default)
    hi = jax.lax.Precision.HIGHEST
    ref = jnp.dot(
        jax.nn.gelu(jnp.dot(x, w1, precision=hi) + b1, approximate=False),
        w2, precision=hi) + b2

    # 1) f32 params / f32 input (torch defaults), resident-weight fused kernel.
    fwd_f32 = jax.jit(make_mlp_forward(w1, b1, w2, b2))
    out_f32 = jax.block_until_ready(fwd_f32(x))
    assert out_f32.shape == (B, N, OUT_F), out_f32.shape
    assert out_f32.dtype == x.dtype
    assert bool(jnp.all(jnp.isfinite(out_f32)))
    err = float(jnp.max(jnp.abs(out_f32 - ref)))
    assert err < 2e-2, err

    # 2) bf16 MXU-native path (parameters + activations in bf16, f32 accum).
    fwd_bf16 = jax.jit(make_mlp_forward(w1, b1, w2, b2, param_dtype=jnp.bfloat16))
    out_bf16 = jax.block_until_ready(fwd_bf16(x.astype(jnp.bfloat16)))
    assert out_bf16.dtype == jnp.bfloat16
    err = float(jnp.max(jnp.abs(out_bf16.astype(jnp.float32) - ref)))
    assert err < 5e-2, err

    # 3) hidden-dim-tiled accumulator path (forces 2 hidden tiles, 4 row tiles).
    fwd_tiled = jax.jit(make_mlp_forward(w1, b1, w2, b2, block_h=128, block_m=32))
    out_tiled = jax.block_until_ready(fwd_tiled(x))
    err = float(jnp.max(jnp.abs(out_tiled - ref)))
    assert err < 2e-2, err

    print("KERNEL_OK")
</pallas_src>

<mosaic_0001>
module attributes {stable_mosaic.version = 11 : i64} {
  func.func @_mlp_kernel_resident(%arg0: i32, %arg1: memref<56x128xf32, #tpu.memory_space<vmem>>, %arg2: memref<128x256xf32, #tpu.memory_space<vmem>>, %arg3: memref<1x256xf32, #tpu.memory_space<vmem>>, %arg4: memref<256x128xf32, #tpu.memory_space<vmem>>, %arg5: memref<1x128xf32, #tpu.memory_space<vmem>>, %arg6: memref<56x128xf32, #tpu.memory_space<vmem>>) attributes {dimension_semantics = [#tpu.dimension_semantics<parallel>], iteration_bounds = array<i64: 2>, scalar_prefetch = 0 : i64, scratch_operands = 0 : i64, tpu.core_type = #tpu.core_type<tc>, window_params = [{transform_indices = @transform_0, window_bounds = array<i64: 56, 128>}, {pipeline_mode = #tpu.pipeline_mode<synchronous>, transform_indices = @transform_1, window_bounds = array<i64: 128, 256>}, {pipeline_mode = #tpu.pipeline_mode<synchronous>, transform_indices = @transform_2, window_bounds = array<i64: 1, 256>}, {pipeline_mode = #tpu.pipeline_mode<synchronous>, transform_indices = @transform_3, window_bounds = array<i64: 256, 128>}, {pipeline_mode = #tpu.pipeline_mode<synchronous>, transform_indices = @transform_4, window_bounds = array<i64: 1, 128>}, {transform_indices = @transform_5, window_bounds = array<i64: 56, 128>}]} {
    %c0 = arith.constant 0 : index
    %c0_0 = arith.constant 0 : index
    %0 = vector.load %arg1[%c0, %c0_0] : memref<56x128xf32, #tpu.memory_space<vmem>>, vector<56x128xf32>
    %c0_1 = arith.constant 0 : index
    %c0_2 = arith.constant 0 : index
    %1 = vector.load %arg2[%c0_1, %c0_2] : memref<128x256xf32, #tpu.memory_space<vmem>>, vector<128x256xf32>
    %cst = arith.constant dense<0.000000e+00> : vector<56x256xf32>
    %2 = tpu.matmul %0, %1, %cst {dimension_numbers = #tpu.dot_dimension_numbers<[1], [0], [0], [1], [0, 0, 1, 1], [], []>} : vector<56x128xf32>, vector<128x256xf32>, vector<56x256xf32> -> vector<56x256xf32>
    %c0_3 = arith.constant 0 : index
    %c0_4 = arith.constant 0 : index
    %3 = vector.load %arg3[%c0_3, %c0_4] : memref<1x256xf32, #tpu.memory_space<vmem>>, vector<1x256xf32>
    %4 = vector.broadcast %3 : vector<1x256xf32> to vector<56x256xf32>
    %5 = arith.addf %2, %4 : vector<56x256xf32>
    %cst_5 = arith.constant 5.000000e-01 : f32
    %6 = vector.broadcast %cst_5 : f32 to vector<56x256xf32>
    %7 = arith.mulf %6, %5 : vector<56x256xf32>
    %cst_6 = arith.constant 0.707106769 : f32
    %8 = vector.broadcast %cst_6 : f32 to vector<56x256xf32>
    %9 = arith.mulf %5, %8 : vector<56x256xf32>
    %cst_7 = arith.constant 0.000000e+00 : f32
    %10 = vector.broadcast %cst_7 : f32 to vector<56x256xf32>
    %11 = arith.cmpf oge, %9, %10 : vector<56x256xf32>
    %cst_8 = arith.constant 1.000000e+00 : f32
    %cst_9 = arith.constant -1.000000e+00 : f32
    %12 = vector.broadcast %cst_8 : f32 to vector<56x256xf32>
    %13 = vector.broadcast %cst_9 : f32 to vector<56x256xf32>
    %14 = arith.select %11, %12, %13 : vector<56x256xi1>, vector<56x256xf32>
    %15 = math.absf %9 : vector<56x256xf32>
    %cst_10 = arith.constant 0.327591091 : f32
    %16 = vector.broadcast %cst_10 : f32 to vector<56x256xf32>
    %17 = arith.mulf %16, %15 : vector<56x256xf32>
    %cst_11 = arith.constant 1.000000e+00 : f32
    %18 = vector.broadcast %cst_11 : f32 to vector<56x256xf32>
    %19 = arith.addf %18, %17 : vector<56x256xf32>
    %20 = tpu.reciprocal %19 {approx = true} : vector<56x256xf32> -> vector<56x256xf32>
    %cst_12 = arith.constant 1.06140542 : f32
    %21 = vector.broadcast %cst_12 : f32 to vector<56x256xf32>
    %22 = arith.mulf %20, %21 : vector<56x256xf32>
    %cst_13 = arith.constant -1.45315206 : f32
    %23 = vector.broadcast %cst_13 : f32 to vector<56x256xf32>
    %24 = arith.addf %23, %22 : vector<56x256xf32>
    %25 = arith.mulf %20, %24 : vector<56x256xf32>
    %cst_14 = arith.constant 1.42141378 : f32
    %26 = vector.broadcast %cst_14 : f32 to vector<56x256xf32>
    %27 = arith.addf %26, %25 : vector<56x256xf32>
    %28 = arith.mulf %20, %27 : vector<56x256xf32>
    %cst_15 = arith.constant -0.284496725 : f32
    %29 = vector.broadcast %cst_15 : f32 to vector<56x256xf32>
    %30 = arith.addf %29, %28 : vector<56x256xf32>
    %31 = arith.mulf %20, %30 : vector<56x256xf32>
    %cst_16 = arith.constant 0.254829586 : f32
    %32 = vector.broadcast %cst_16 : f32 to vector<56x256xf32>
    %33 = arith.addf %32, %31 : vector<56x256xf32>
    %34 = arith.mulf %20, %33 : vector<56x256xf32>
    %cst_17 = arith.constant 0.000000e+00 : f32
    %35 = vector.broadcast %cst_17 : f32 to vector<56x256xf32>
    %36 = arith.subf %35, %15 : vector<56x256xf32>
    %37 = arith.mulf %36, %15 : vector<56x256xf32>
    %38 = math.exp %37 : vector<56x256xf32>
    %39 = arith.mulf %34, %38 : vector<56x256xf32>
    %cst_18 = arith.constant 1.000000e+00 : f32
    %40 = vector.broadcast %cst_18 : f32 to vector<56x256xf32>
    %41 = arith.subf %40, %39 : vector<56x256xf32>
    %42 = arith.mulf %14, %41 : vector<56x256xf32>
    %cst_19 = arith.constant 1.000000e+00 : f32
    %43 = vector.broadcast %cst_19 : f32 to vector<56x256xf32>
    %44 = arith.addf %43, %42 : vector<56x256xf32>
    %45 = arith.mulf %7, %44 : vector<56x256xf32>
    %c0_20 = arith.constant 0 : index
    %c0_21 = arith.constant 0 : index
    %46 = vector.load %arg4[%c0_20, %c0_21] : memref<256x128xf32, #tpu.memory_space<vmem>>, vector<256x128xf32>
    %cst_22 = arith.constant dense<0.000000e+00> : vector<56x128xf32>
    %47 = tpu.matmul %45, %46, %cst_22 {dimension_numbers = #tpu.dot_dimension_numbers<[1], [0], [0], [1], [0, 0, 1, 1], [], []>} : vector<56x256xf32>, vector<256x128xf32>, vector<56x128xf32> -> vector<56x128xf32>
    %c0_23 = arith.constant 0 : index
    %c0_24 = arith.constant 0 : index
    %48 = vector.load %arg5[%c0_23, %c0_24] : memref<1x128xf32, #tpu.memory_space<vmem>>, vector<1x128xf32>
    %49 = vector.broadcast %48 : vector<1x128xf32> to vector<56x128xf32>
    %50 = arith.addf %47, %49 : vector<56x128xf32>
    %c0_25 = arith.constant 0 : index
    %c0_26 = arith.constant 0 : index
    %51 = vector.load %arg6[%c0_25, %c0_26] : memref<56x128xf32, #tpu.memory_space<vmem>>, vector<56x128xf32>
    tpu.vector_store %arg6[%c0_25, %c0_26], %50 {strides = array<i32>} : memref<56x128xf32, #tpu.memory_space<vmem>>, vector<56x128xf32>,
    return
  }
  func.func @transform_0(%arg0: i32) -> (i32, i32) {
    %c0_i32 = arith.constant 0 : i32
    %c0_i32_0 = arith.constant 0 : i32
    return %arg0, %c0_i32 : i32, i32
  }
  func.func @transform_1(%arg0: i32) -> (i32, i32) {
    %c0_i32 = arith.constant 0 : i32
    %c0_i32_0 = arith.constant 0 : i32
    %c0_i32_1 = arith.constant 0 : i32
    return %c0_i32, %c0_i32_0 : i32, i32
  }
  func.func @transform_2(%arg0: i32) -> (i32, i32) {
    %c0_i32 = arith.constant 0 : i32
    %c0_i32_0 = arith.constant 0 : i32
    %c0_i32_1 = arith.constant 0 : i32
    return %c0_i32, %c0_i32_0 : i32, i32
  }
  func.func @transform_3(%arg0: i32) -> (i32, i32) {
    %c0_i32 = arith.constant 0 : i32
    %c0_i32_0 = arith.constant 0 : i32
    %c0_i32_1 = arith.constant 0 : i32
    return %c0_i32, %c0_i32_0 : i32, i32
  }
  func.func @transform_4(%arg0: i32) -> (i32, i32) {
    %c0_i32 = arith.constant 0 : i32
    %c0_i32_0 = arith.constant 0 : i32
    %c0_i32_1 = arith.constant 0 : i32
    return %c0_i32, %c0_i32_0 : i32, i32
  }
  func.func @transform_5(%arg0: i32) -> (i32, i32) {
    %c0_i32 = arith.constant 0 : i32
    %c0_i32_0 = arith.constant 0 : i32
    return %arg0, %c0_i32 : i32, i32
  }
}

</mosaic_0001>

<llo_original>
// kernel: forward.1
$region0: #{forward.1}
  #allocation0 [shape = 'u32[]', space=smem, size = 0x4, offset = 0x4, fixed_abs, tag = 'smem constant byte address 0x4 - core index']
  #allocation1 [shape = 'u32[72,128]{1,0:T(1,128)}', space=vmem, size = 0x9000, scoped, tag = 'internal scratch']
  %s0 = inlined_call_operand.vmem [shape: f32[112,128], index: 0, kind: input, shape index: {}]
  %s1 = inlined_call_operand.vmem [shape: f32[128,256], index: 1, kind: input, shape index: {}]
  %s2 = inlined_call_operand.vmem [shape: f32[1,256], index: 2, kind: input, shape index: {}]
  %s3 = inlined_call_operand.vmem [shape: f32[256,128], index: 3, kind: input, shape index: {}]
  %s4 = inlined_call_operand.vmem [shape: f32[1,128], index: 4, kind: input, shape index: {}]
  %s5 = inlined_call_operand.vmem [shape: f32[112,128], index: 5, kind: output, shape index: {}]
  %s6 = sld [smem:[#allocation0]]
  $region53: #{forward.1} parent=0
    _
  %s8 = ssub.s32 1, %s6
  %s9 = scalar_select 0, %s8, %s6
  loop: start=0, step=1, limit=4
  $region2: #{forward.1} parent=0 // loop_pre_header
    _
  $region3: #{forward.1} parent=0 // loop_header
    %s11 = sphi 0, %s15
    %p12 = scmp.ge.s32.totalorder %s11, 4
    %s21 = sphi 0, %s23
    %s24 = sphi 0, %s21
    %s25 = sphi 0, %s24
    %s41 = sphi 0, %s25
    %s45 = sphi 0, %s45
    %s47 = sphi 0, %s45
    %s48 = sphi 0, %s47
    %s62 = sphi 0, %s48
    %s66 = sphi 0, %s66
    %s68 = sphi 0, %s66
    %s69 = sphi 0, %s68
    %s83 = sphi 0, %s69
    %s87 = sphi 0, %s87
    %s89 = sphi 0, %s87
    %s90 = sphi 0, %s89
    %s104 = sphi 0, %s90
    %s108 = sphi 0, %s108
    %s110 = sphi 0, %s108
    %s111 = sphi 0, %s110
    %s125 = sphi 0, %s111
    %s131 = sphi 0, %s133
    %s134 = sphi 0, %s131
    %s135 = sphi 0, %s134
    %s151 = sphi 0, %s135
  $region4: #{forward.1} parent=0 // loop_header_branch
    %14 = sbr.rel (%p12) target = $region8
  $region5: #{forward.1} parent=0 // loop_body
    %s16 = ssub.s32 %s11, 1
    %s17 = ssub.s32 %s11, 2
    %s18 = sadd.s32 %s11, 1
    %s19 = ssub.s32 %s11, %s18
    %p20 = scmp.eq.s32.totalorder %s19, 0
    %s22 = sadd.s32 %s21, 1
    %s23 = scalar_select %p20, %s21, %s22
    %p26 = pneg %p20
    %p27 = scmp.eq.s32.totalorder %s11, 1
    %p28 = por %p26, %p27
    %p29 = scmp.ne.s32.totalorder %s21, %s24
    %p30 = scmp.eq.s32.totalorder %s11, 0
    %p31 = por %p29, %p30
    %p32 = scmp.ne.s32.totalorder %s21, %s24
    %p33 = scmp.eq.s32.totalorder %s16, 1
    %p34 = por %p32, %p33
    %p35 = scmp.ne.s32.totalorder %s24, %s25
    %p36 = scmp.eq.s32.totalorder %s16, 0
    %p37 = por %p35, %p36
    %p38 = scmp.ne.s32.totalorder %s24, %s25
    %p39 = scmp.eq.s32.totalorder %s17, 1
    %p40 = por %p38, %p39
    %p42 = scmp.ne.s32.totalorder %s25, %s41
    %p43 = scmp.eq.s32.totalorder %s17, 0
    %p44 = por %p42, %p43
    %s46 = sadd.s32 %s45, 1
    %p49 = scmp.eq.s32.totalorder %s11, 1
    %p50 = scmp.ne.s32.totalorder %s45, %s47
    %p51 = scmp.eq.s32.totalorder %s11, 0
    %p52 = por %p50, %p51
    %p53 = scmp.ne.s32.totalorder %s45, %s47
    %p54 = scmp.eq.s32.totalorder %s16, 1
    %p55 = por %p53, %p54
    %p56 = scmp.ne.s32.totalorder %s47, %s48
    %p57 = scmp.eq.s32.totalorder %s16, 0
    %p58 = por %p56, %p57
    %p59 = scmp.ne.s32.totalorder %s47, %s48
    %p60 = scmp.eq.s32.totalorder %s17, 1
    %p61 = por %p59, %p60
    %p63 = scmp.ne.s32.totalorder %s48, %s62
    %p64 = scmp.eq.s32.totalorder %s17, 0
    %p65 = por %p63, %p64
    %s67 = sadd.s32 %s66, 1
    %p70 = scmp.eq.s32.totalorder %s11, 1
    %p71 = scmp.ne.s32.totalorder %s66, %s68
    %p72 = scmp.eq.s32.totalorder %s11, 0
    %p73 = por %p71, %p72
    %p74 = scmp.ne.s32.totalorder %s66, %s68
    %p75 = scmp.eq.s32.totalorder %s16, 1
    %p76 = por %p74, %p75
    %p77 = scmp.ne.s32.totalorder %s68, %s69
    %p78 = scmp.eq.s32.totalorder %s16, 0
    %p79 = por %p77, %p78
    %p80 = scmp.ne.s32.totalorder %s68, %s69
    %p81 = scmp.eq.s32.totalorder %s17, 1
    %p82 = por %p80, %p81
    %p84 = scmp.ne.s32.totalorder %s69, %s83
    %p85 = scmp.eq.s32.totalorder %s17, 0
    %p86 = por %p84, %p85
    %s88 = sadd.s32 %s87, 1
    %p91 = scmp.eq.s32.totalorder %s11, 1
    %p92 = scmp.ne.s32.totalorder %s87, %s89
    %p93 = scmp.eq.s32.totalorder %s11, 0
    %p94 = por %p92, %p93
    %p95 = scmp.ne.s32.totalorder %s87, %s89
    %p96 = scmp.eq.s32.totalorder %s16, 1
    %p97 = por %p95, %p96
    %p98 = scmp.ne.s32.totalorder %s89, %s90
    %p99 = scmp.eq.s32.totalorder %s16, 0
    %p100 = por %p98, %p99
    %p101 = scmp.ne.s32.totalorder %s89, %s90
    %p102 = scmp.eq.s32.totalorder %s17, 1
    %p103 = por %p101, %p102
    %p105 = scmp.ne.s32.totalorder %s90, %s104
    %p106 = scmp.eq.s32.totalorder %s17, 0
    %p107 = por %p105, %p106
    %s109 = sadd.s32 %s108, 1
    %p112 = scmp.eq.s32.totalorder %s11, 1
    %p113 = scmp.ne.s32.totalorder %s108, %s110
    %p114 = scmp.eq.s32.totalorder %s11, 0
    %p115 = por %p113, %p114
    %p116 = scmp.ne.s32.totalorder %s108, %s110
    %p117 = scmp.eq.s32.totalorder %s16, 1
    %p118 = por %p116, %p117
    %p119 = scmp.ne.s32.totalorder %s110, %s111
    %p120 = scmp.eq.s32.totalorder %s16, 0
    %p121 = por %p119, %p120
    %p122 = scmp.ne.s32.totalorder %s110, %s111
    %p123 = scmp.eq.s32.totalorder %s17, 1
    %p124 = por %p122, %p123
    %p126 = scmp.ne.s32.totalorder %s111, %s125
    %p127 = scmp.eq.s32.totalorder %s17, 0
    %p128 = por %p126, %p127
    %s129 = ssub.s32 %s11, %s18
    %p130 = scmp.eq.s32.totalorder %s129, 0
    %s132 = sadd.s32 %s131, 1
    %s133 = scalar_select %p130, %s131, %s132
    %p136 = pneg %p130
    %p137 = scmp.eq.s32.totalorder %s11, 1
    %p138 = por %p136, %p137
    %p139 = scmp.ne.s32.totalorder %s131, %s134
    %p140 = scmp.eq.s32.totalorder %s11, 0
    %p141 = por %p139, %p140
    %p142 = scmp.ne.s32.totalorder %s131, %s134
    %p143 = scmp.eq.s32.totalorder %s16, 1
    %p144 = por %p142, %p143
    %p145 = scmp.ne.s32.totalorder %s134, %s135
    %p146 = scmp.eq.s32.totalorder %s16, 0
    %p147 = por %p145, %p146
    %p148 = scmp.ne.s32.totalorder %s134, %s135
    %p149 = scmp.eq.s32.totalorder %s17, 1
    %p150 = por %p148, %p149
    %p152 = scmp.ne.s32.totalorder %s135, %s151
    %p153 = scmp.eq.s32.totalorder %s17, 0
    %p154 = por %p152, %p153
    %p155 = scmp.le.s32.totalorder 1, %s11
    %p156 = scmp.lt.s32.totalorder %s11, 3
    %p157 = pnand %p155, %p156
    %p158 = pneg %p157
    // Predicated region
    $region9: #{forward.1} parent=5 // pred_check
      _
    $region10: #{forward.1} parent=5 // pred_check_branch
      %160 = sbr.rel (%p157) target = $region12
    $region11: #{forward.1} parent=5 // pred_region
      %s161 = ssub.s32 %s11, 1
      // Predicated region
      $region13: #{forward.1} parent=11 // pred_check
        %p162 = pneg %p58
      $region14: #{forward.1} parent=11 // pred_check_branch
        %164 = sbr.rel (%p162) target = $region16
      $region15: #{forward.1} parent=11 // pred_region
        _
      $region16: #{forward.1} parent=11 // pred_fallthru
        _
      // Predicated region
      $region17: #{forward.1} parent=11 // pred_check
        %p165 = pneg %p79
      $region18: #{forward.1} parent=11 // pred_check_branch
        %167 = sbr.rel (%p165) target = $region20
      $region19: #{forward.1} parent=11 // pred_region
        _
      $region20: #{forward.1} parent=11 // pred_fallthru
        _
      // Predicated region
      $region21: #{forward.1} parent=11 // pred_check
        %p168 = pneg %p100
      $region22: #{forward.1} parent=11 // pred_check_branch
        %170 = sbr.rel (%p168) target = $region24
      $region23: #{forward.1} parent=11 // pred_region
        _
      $region24: #{forward.1} parent=11 // pred_fallthru
        _
      // Predicated region
      $region25: #{forward.1} parent=11 // pred_check
        %p171 = pneg %p121
      $region26: #{forward.1} parent=11 // pred_check_branch
        %173 = sbr.rel (%p171) target = $region28
      $region27: #{forward.1} parent=11 // pred_region
        _
      $region28: #{forward.1} parent=11 // pred_fallthru
        _
    $region12: #{forward.1} parent=5 // pred_fallthru
      _
    %p174 = scmp.lt.s32.totalorder %s11, 2
    // Predicated region
    $region29: #{forward.1} parent=5 // pred_check
      %p175 = pneg %p174
    $region30: #{forward.1} parent=5 // pred_check_branch
      %177 = sbr.rel (%p175) target = $region32
    $region31: #{forward.1} parent=5 // pred_region
      // Predicated region
      $region33: #{forward.1} parent=31 // pred_check
        %p178 = pneg %p31
      $region34: #{forward.1} parent=31 // pred_check_branch
        %180 = sbr.rel (%p178) target = $region36
      $region35: #{forward.1} parent=31 // pred_region
        %s181 = smul.u32 7, %s11
        %p182 = scmp.lt.s32.totalorder %s181, 13
        %s183 = scalar_select %p182, %s181, 13
        %s184 = smul.addr %s183, 8
        %s185 = scalar_lea.vmem %s0, %s184
        %s186 = smul.u32 7, %s11
      $region36: #{forward.1} parent=31 // pred_fallthru
        _
    $region32: #{forward.1} parent=5 // pred_fallthru
      _
    %p187 = scmp.le.s32.totalorder 1, %s11
    %p188 = scmp.lt.s32.totalorder %s11, 3
    %p189 = pnand %p187, %p188
    %p190 = pneg %p189
    // Predicated region
    $region37: #{forward.1} parent=5 // pred_check
      _
    $region38: #{forward.1} parent=5 // pred_check_branch
      %192 = sbr.rel (%p189) target = $region40
    $region39: #{forward.1} parent=5 // pred_region
      %s193 = ssub.s32 %s11, 1
      %s194 = smul.u32 7, %s16
      %p195 = scmp.lt.s32.totalorder %s194, 13
      %s196 = scalar_select %p195, %s194, 13
      %s197 = smul.addr %s196, 8
      %s198 = scalar_lea.vmem %s0, %s197
      %p199 = pneg %p37
      %p200 = pneg %p34
      %p201 = pneg %p58
      %p202 = pneg %p55
      %p203 = pneg %p79
      %p204 = pneg %p76
      %p205 = pneg %p100
      %p206 = pneg %p97
      %p207 = pneg %p121
      %p208 = pneg %p118
      %p209 = pneg %p147
      %p210 = pneg %p144
      %s211 = smul.u32 7, %s16
      %p212 = scmp.lt.s32.totalorder %s211, 13
      %s213 = scalar_select %p212, %s211, 13
      %s214 = smul.addr %s213, 8
      %s215 = scalar_lea.vmem %s5, %s214
      %s216 = smul.u32 7, %s16
      %p217 = scmp.lt.s32.totalorder %s216, 13
      %s218 = scalar_select %p217, %s216, 13
      %s219 = smul.addr %s218, 8
      %s220 = scalar_lea.vmem %s0, %s219
      %s221 = smul.u32 7, %s16
      %s222 = smul.u32 7, %s16
      %p223 = scmp.lt.s32.totalorder %s222, 13
      %s224 = scalar_select %p223, %s222, 13
      %s225 = smul.addr %s224, 8
      %s226 = scalar_lea.vmem %s5, %s225
      %s227 = smul.u32 7, %s16
      %v228 = vld [vmem:[%s220] sm:$0xff]
      %v229 = vld [vmem:[%s220 + $0x8] sm:$0xff]
      %v230 = vld [vmem:[%s220 + $0x10] sm:$0xff]
      %v231 = vld [vmem:[%s220 + $0x18] sm:$0xff]
      %v232 = vld [vmem:[%s220 + $0x20] sm:$0xff]
      %v233 = vld [vmem:[%s220 + $0x28] sm:$0xff]
      %v234 = vld [vmem:[%s220 + $0x30] sm:$0xff]
      %v235 = vld [vmem:[%s1] sm:$0xff]
      %v236 = vld [vmem:[%s1 + $0x8] sm:$0xff]
      %v237 = vld [vmem:[%s1 + $0x10] sm:$0xff]
      %v238 = vld [vmem:[%s1 + $0x18] sm:$0xff]
      %v239 = vld [vmem:[%s1 + $0x20] sm:$0xff]
      %v240 = vld [vmem:[%s1 + $0x28] sm:$0xff]
      %v241 = vld [vmem:[%s1 + $0x30] sm:$0xff]
      %v242 = vld [vmem:[%s1 + $0x38] sm:$0xff]
      %v243 = vld [vmem:[%s1 + $0x40] sm:$0xff]
      %v244 = vld [vmem:[%s1 + $0x48] sm:$0xff]
      %v245 = vld [vmem:[%s1 + $0x50] sm:$0xff]
      %v246 = vld [vmem:[%s1 + $0x58] sm:$0xff]
      %v247 = vld [vmem:[%s1 + $0x60] sm:$0xff]
      %v248 = vld [vmem:[%s1 + $0x68] sm:$0xff]
      %v249 = vld [vmem:[%s1 + $0x70] sm:$0xff]
      %v250 = vld [vmem:[%s1 + $0x78] sm:$0xff]
      %v251 = vld [vmem:[%s1 + $0x80] sm:$0xff]
      %v252 = vld [vmem:[%s1 + $0x88] sm:$0xff]
      %v253 = vld [vmem:[%s1 + $0x90] sm:$0xff]
      %v254 = vld [vmem:[%s1 + $0x98] sm:$0xff]
      %v255 = vld [vmem:[%s1 + $0xa0] sm:$0xff]
      %v256 = vld [vmem:[%s1 + $0xa8] sm:$0xff]
      %v257 = vld [vmem:[%s1 + $0xb0] sm:$0xff]
      %v258 = vld [vmem:[%s1 + $0xb8] sm:$0xff]
      %v259 = vld [vmem:[%s1 + $0xc0] sm:$0xff]
      %v260 = vld [vmem:[%s1 + $0xc8] sm:$0xff]
      %v261 = vld [vmem:[%s1 + $0xd0] sm:$0xff]
      %v262 = vld [vmem:[%s1 + $0xd8] sm:$0xff]
      %v263 = vld [vmem:[%s1 + $0xe0] sm:$0xff]
      %v264 = vld [vmem:[%s1 + $0xe8] sm:$0xff]
      %v265 = vld [vmem:[%s1 + $0xf0] sm:$0xff]
      %v266 = vld [vmem:[%s1 + $0xf8] sm:$0xff]
      %v267 = vld [vmem:[%s2] sm:$0x3]
      %v269 = vperm.slane %v267, 0
      %v270 = vperm.slane %v267, 1
      %273 = vmatpush.msra.mxu0 %v265
      %274 = vmatpush.msra.mxu0 %v263
      %275 = vmatpush.msra.mxu0 %v261
      %276 = vmatpush.msra.mxu0 %v259
      %277 = vmatpush.msra.mxu0 %v257
      %278 = vmatpush.msra.mxu0 %v255
      %279 = vmatpush.msra.mxu0 %v253
      %280 = vmatpush.msra.mxu0 %v251
      %281 = vmatpush.msra.mxu0 %v249
      %282 = vmatpush.msra.mxu0 %v247
      %283 = vmatpush.msra.mxu0 %v245
      %284 = vmatpush.msra.mxu0 %v243
      %285 = vmatpush.msra.mxu0 %v241
      %286 = vmatpush.msra.mxu0 %v239
      %287 = vmatpush.msra.mxu0 %v237
      %288 = vmatpush.msra.mxu0 %v235
      %289 = vmatmul.f32.gmra.mxu0 %v228
      %v290 = vpop.f32.mrf.mxu0
      %v291 = vadd.f32 %v269, %v290
      %292 = vmatmul.f32.gmra.mxu0 %v229
      %v293 = vpop.f32.mrf.mxu0
      %v294 = vadd.f32 %v269, %v293
      %295 = vmatmul.f32.gmra.mxu0 %v230
      %v296 = vpop.f32.mrf.mxu0
      %v297 = vadd.f32 %v269, %v296
      %298 = vmatmul.f32.gmra.mxu0 %v231
      %v299 = vpop.f32.mrf.mxu0
      %v300 = vadd.f32 %v269, %v299
      %301 = vmatmul.f32.gmra.mxu0 %v232
      %v302 = vpop.f32.mrf.mxu0
      %v303 = vadd.f32 %v269, %v302
      %304 = vmatmul.f32.gmra.mxu0 %v233
      %v305 = vpop.f32.mrf.mxu0
      %v306 = vadd.f32 %v269, %v305
      %307 = vmatmul.f32.gmra.mxu0 %v234
      %v308 = vpop.f32.mrf.mxu0
      %v309 = vadd.f32 %v269, %v308
      %310 = vdwg.mxu0
      %311 = vmatpush.msra.mxu0 %v266
      %312 = vmatpush.msra.mxu0 %v264
      %313 = vmatpush.msra.mxu0 %v262
      %314 = vmatpush.msra.mxu0 %v260
      %315 = vmatpush.msra.mxu0 %v258
      %316 = vmatpush.msra.mxu0 %v256
      %317 = vmatpush.msra.mxu0 %v254
      %318 = vmatpush.msra.mxu0 %v252
      %319 = vmatpush.msra.mxu0 %v250
      %320 = vmatpush.msra.mxu0 %v248
      %321 = vmatpush.msra.mxu0 %v246
      %322 = vmatpush.msra.mxu0 %v244
      %323 = vmatpush.msra.mxu0 %v242
      %324 = vmatpush.msra.mxu0 %v240
      %325 = vmatpush.msra.mxu0 %v238
      %326 = vmatpush.msra.mxu0 %v236
      %327 = vmatmul.f32.gmra.mxu0 %v228
      %v328 = vpop.f32.mrf.mxu0
      %v329 = vadd.f32 %v270, %v328
      %330 = vmatmul.f32.gmra.mxu0 %v229
      %v331 = vpop.f32.mrf.mxu0
      %v332 = vadd.f32 %v270, %v331
      %333 = vmatmul.f32.gmra.mxu0 %v230
      %v334 = vpop.f32.mrf.mxu0
      %v335 = vadd.f32 %v270, %v334
      %336 = vmatmul.f32.gmra.mxu0 %v231
      %v337 = vpop.f32.mrf.mxu0
      %v338 = vadd.f32 %v270, %v337
      %339 = vmatmul.f32.gmra.mxu0 %v232
      %v340 = vpop.f32.mrf.mxu0
      %v341 = vadd.f32 %v270, %v340
      %342 = vmatmul.f32.gmra.mxu0 %v233
      %v343 = vpop.f32.mrf.mxu0
      %v344 = vadd.f32 %v270, %v343
      %345 = vmatmul.f32.gmra.mxu0 %v234
      %v346 = vpop.f32.mrf.mxu0
      %v347 = vadd.f32 %v270, %v346
      %348 = vdwg.mxu0
      %v349 = vmul.f32 %v291, 0.5
      %v350 = vmul.f32 %v329, 0.5
      %v351 = vmul.f32 %v294, 0.5
      %v352 = vmul.f32 %v332, 0.5
      %v353 = vmul.f32 %v297, 0.5
      %v354 = vmul.f32 %v335, 0.5
      %v355 = vmul.f32 %v300, 0.5
      %v356 = vmul.f32 %v338, 0.5
      %v357 = vmul.f32 %v303, 0.5
      %v358 = vmul.f32 %v341, 0.5
      %v359 = vmul.f32 %v306, 0.5
      %v360 = vmul.f32 %v344, 0.5
      %v361 = vmul.f32 %v309, 0.5
      %v362 = vmul.f32 %v347, 0.5
      %v363 = vmul.f32 %v291, 0.70710677
      %v364 = vmul.f32 %v329, 0.70710677
      %v365 = vmul.f32 %v294, 0.70710677
      %v366 = vmul.f32 %v332, 0.70710677
      %v367 = vmul.f32 %v297, 0.70710677
      %v368 = vmul.f32 %v335, 0.70710677
      %v369 = vmul.f32 %v300, 0.70710677
      %v370 = vmul.f32 %v338, 0.70710677
      %v371 = vmul.f32 %v303, 0.70710677
      %v372 = vmul.f32 %v341, 0.70710677
      %v373 = vmul.f32 %v306, 0.70710677
      %v374 = vmul.f32 %v344, 0.70710677
      %v375 = vmul.f32 %v309, 0.70710677
      %v376 = vmul.f32 %v347, 0.70710677
      %vm377 = vcmp.ge.f32.partialorder %v363, 0.0
      %vm378 = vcmp.ge.f32.partialorder %v364, 0.0
      %vm379 = vcmp.ge.f32.partialorder %v365, 0.0
      %vm380 = vcmp.ge.f32.partialorder %v366, 0.0
      %vm381 = vcmp.ge.f32.partialorder %v367, 0.0
      %vm382 = vcmp.ge.f32.partialorder %v368, 0.0
      %vm383 = vcmp.ge.f32.partialorder %v369, 0.0
      %vm384 = vcmp.ge.f32.partialorder %v370, 0.0
      %vm385 = vcmp.ge.f32.partialorder %v371, 0.0
      %vm386 = vcmp.ge.f32.partialorder %v372, 0.0
      %vm387 = vcmp.ge.f32.partialorder %v373, 0.0
      %vm388 = vcmp.ge.f32.partialorder %v374, 0.0
      %vm389 = vcmp.ge.f32.partialorder %v375, 0.0
      %vm390 = vcmp.ge.f32.partialorder %v376, 0.0
      %v391 = vsel %vm377, 1.0, -1.0
      %v392 = vsel %vm378, 1.0, -1.0
      %v393 = vsel %vm379, 1.0, -1.0
      %v394 = vsel %vm380, 1.0, -1.0
      %v395 = vsel %vm381, 1.0, -1.0
      %v396 = vsel %vm382, 1.0, -1.0
      %v397 = vsel %vm383, 1.0, -1.0
      %v398 = vsel %vm384, 1.0, -1.0
      %v399 = vsel %vm385, 1.0, -1.0
      %v400 = vsel %vm386, 1.0, -1.0
      %v401 = vsel %vm387, 1.0, -1.0
      %v402 = vsel %vm388, 1.0, -1.0
      %v403 = vsel %vm389, 1.0, -1.0
      %v404 = vsel %vm390, 1.0, -1.0
      %v405 = vand.u32 2147483647, %v363
      %v406 = vand.u32 2147483647, %v364
      %v407 = vand.u32 2147483647, %v365
      %v408 = vand.u32 2147483647, %v366
      %v409 = vand.u32 2147483647, %v367
      %v410 = vand.u32 2147483647, %v368
      %v411 = vand.u32 2147483647, %v369
      %v412 = vand.u32 2147483647, %v370
      %v413 = vand.u32 2147483647, %v371
      %v414 = vand.u32 2147483647, %v372
      %v415 = vand.u32 2147483647, %v373
      %v416 = vand.u32 2147483647, %v374
      %v417 = vand.u32 2147483647, %v375
      %v418 = vand.u32 2147483647, %v376
      %v419 = vmul.f32 %v405, 0.3275911
      %v420 = vmul.f32 %v406, 0.3275911
      %v421 = vmul.f32 %v407, 0.3275911
      %v422 = vmul.f32 %v408, 0.3275911
      %v423 = vmul.f32 %v409, 0.3275911
      %v424 = vmul.f32 %v410, 0.3275911
      %v425 = vmul.f32 %v411, 0.3275911
      %v426 = vmul.f32 %v412, 0.3275911
      %v427 = vmul.f32 %v413, 0.3275911
      %v428 = vmul.f32 %v414, 0.3275911
      %v429 = vmul.f32 %v415, 0.3275911
      %v430 = vmul.f32 %v416, 0.3275911
      %v431 = vmul.f32 %v417, 0.3275911
      %v432 = vmul.f32 %v418, 0.3275911
      %v433 = vadd.f32 %v419, 1.0
      %v434 = vadd.f32 %v420, 1.0
      %v435 = vadd.f32 %v421, 1.0
      %v436 = vadd.f32 %v422, 1.0
      %v437 = vadd.f32 %v423, 1.0
      %v438 = vadd.f32 %v424, 1.0
      %v439 = vadd.f32 %v425, 1.0
      %v440 = vadd.f32 %v426, 1.0
      %v441 = vadd.f32 %v427, 1.0
      %v442 = vadd.f32 %v428, 1.0
      %v443 = vadd.f32 %v429, 1.0
      %v444 = vadd.f32 %v430, 1.0
      %v445 = vadd.f32 %v431, 1.0
      %v446 = vadd.f32 %v432, 1.0
      %v447 = vrcp.pop %v433
      %v448 = vrcp.pop %v434
      %v449 = vrcp.pop %v435
      %v450 = vrcp.pop %v436
      %v451 = vrcp.pop %v437
      %v452 = vrcp.pop %v438
      %v453 = vrcp.pop %v439
      %v454 = vrcp.pop %v440
      %v455 = vrcp.pop %v441
      %v456 = vrcp.pop %v442
      %v457 = vrcp.pop %v443
      %v458 = vrcp.pop %v444
      %v459 = vrcp.pop %v445
      %v460 = vrcp.pop %v446
      %v461 = vmul.f32 %v447, 1.0614054
      %v462 = vmul.f32 %v448, 1.0614054
      %v463 = vmul.f32 %v449, 1.0614054
      %v464 = vmul.f32 %v450, 1.0614054
      %v465 = vmul.f32 %v451, 1.0614054
      %v466 = vmul.f32 %v452, 1.0614054
      %v467 = vmul.f32 %v453, 1.0614054
      %v468 = vmul.f32 %v454, 1.0614054
      %v469 = vmul.f32 %v455, 1.0614054
      %v470 = vmul.f32 %v456, 1.0614054
      %v471 = vmul.f32 %v457, 1.0614054
      %v472 = vmul.f32 %v458, 1.0614054
      %v473 = vmul.f32 %v459, 1.0614054
      %v474 = vmul.f32 %v460, 1.0614054
      %v475 = vadd.f32 %v461, -1.4531521
      %v476 = vadd.f32 %v462, -1.4531521
      %v477 = vadd.f32 %v463, -1.4531521
      %v478 = vadd.f32 %v464, -1.4531521
      %v479 = vadd.f32 %v465, -1.4531521
      %v480 = vadd.f32 %v466, -1.4531521
      %v481 = vadd.f32 %v467, -1.4531521
      %v482 = vadd.f32 %v468, -1.4531521
      %v483 = vadd.f32 %v469, -1.4531521
      %v484 = vadd.f32 %v470, -1.4531521
      %v485 = vadd.f32 %v471, -1.4531521
      %v486 = vadd.f32 %v472, -1.4531521
      %v487 = vadd.f32 %v473, -1.4531521
      %v488 = vadd.f32 %v474, -1.4531521
      %v489 = vmul.f32 %v447, %v475
      %v490 = vmul.f32 %v448, %v476
      %v491 = vmul.f32 %v449, %v477
      %v492 = vmul.f32 %v450, %v478
      %v493 = vmul.f32 %v451, %v479
      %v494 = vmul.f32 %v452, %v480
      %v495 = vmul.f32 %v453, %v481
      %v496 = vmul.f32 %v454, %v482
      %v497 = vmul.f32 %v455, %v483
      %v498 = vmul.f32 %v456, %v484
      %v499 = vmul.f32 %v457, %v485
      %v500 = vmul.f32 %v458, %v486
      %v501 = vmul.f32 %v459, %v487
      %v502 = vmul.f32 %v460, %v488
      %v503 = vadd.f32 %v489, 1.4214138
      %v504 = vadd.f32 %v490, 1.4214138
      %v505 = vadd.f32 %v491, 1.4214138
      %v506 = vadd.f32 %v492, 1.4214138
      %v507 = vadd.f32 %v493, 1.4214138
      %v508 = vadd.f32 %v494, 1.4214138
      %v509 = vadd.f32 %v495, 1.4214138
      %v510 = vadd.f32 %v496, 1.4214138
      %v511 = vadd.f32 %v497, 1.4214138
      %v512 = vadd.f32 %v498, 1.4214138
      %v513 = vadd.f32 %v499, 1.4214138
      %v514 = vadd.f32 %v500, 1.4214138
      %v515 = vadd.f32 %v501, 1.4214138
      %v516 = vadd.f32 %v502, 1.4214138
      %v517 = vmul.f32 %v447, %v503
      %v518 = vmul.f32 %v448, %v504
      %v519 = vmul.f32 %v449, %v505
      %v520 = vmul.f32 %v450, %v506
      %v521 = vmul.f32 %v451, %v507
      %v522 = vmul.f32 %v452, %v508
      %v523 = vmul.f32 %v453, %v509
      %v524 = vmul.f32 %v454, %v510
      %v525 = vmul.f32 %v455, %v511
      %v526 = vmul.f32 %v456, %v512
      %v527 = vmul.f32 %v457, %v513
      %v528 = vmul.f32 %v458, %v514
      %v529 = vmul.f32 %v459, %v515
      %v530 = vmul.f32 %v460, %v516
      %v531 = vadd.f32 %v517, -0.28449672
      %v532 = vadd.f32 %v518, -0.28449672
      %v533 = vadd.f32 %v519, -0.28449672
      %v534 = vadd.f32 %v520, -0.28449672
      %v535 = vadd.f32 %v521, -0.28449672
      %v536 = vadd.f32 %v522, -0.28449672
      %v537 = vadd.f32 %v523, -0.28449672
      %v538 = vadd.f32 %v524, -0.28449672
      %v539 = vadd.f32 %v525, -0.28449672
      %v540 = vadd.f32 %v526, -0.28449672
      %v541 = vadd.f32 %v527, -0.28449672
      %v542 = vadd.f32 %v528, -0.28449672
      %v543 = vadd.f32 %v529, -0.28449672
      %v544 = vadd.f32 %v530, -0.28449672
      %v545 = vmul.f32 %v447, %v531
      %v546 = vmul.f32 %v448, %v532
      %v547 = vmul.f32 %v449, %v533
      %v548 = vmul.f32 %v450, %v534
      %v549 = vmul.f32 %v451, %v535
      %v550 = vmul.f32 %v452, %v536
      %v551 = vmul.f32 %v453, %v537
      %v552 = vmul.f32 %v454, %v538
      %v553 = vmul.f32 %v455, %v539
      %v554 = vmul.f32 %v456, %v540
      %v555 = vmul.f32 %v457, %v541
      %v556 = vmul.f32 %v458, %v542
      %v557 = vmul.f32 %v459, %v543
      %v558 = vmul.f32 %v460, %v544
      %v559 = vadd.f32 %v545, 0.2548296
      %v560 = vadd.f32 %v546, 0.2548296
      %v561 = vadd.f32 %v547, 0.2548296
      %v562 = vadd.f32 %v548, 0.2548296
      %v563 = vadd.f32 %v549, 0.2548296
      %v564 = vadd.f32 %v550, 0.2548296
      %v565 = vadd.f32 %v551, 0.2548296
      %v566 = vadd.f32 %v552, 0.2548296
      %v567 = vadd.f32 %v553, 0.2548296
      %v568 = vadd.f32 %v554, 0.2548296
      %v569 = vadd.f32 %v555, 0.2548296
      %v570 = vadd.f32 %v556, 0.2548296
      %v571 = vadd.f32 %v557, 0.2548296
      %v572 = vadd.f32 %v558, 0.2548296
      %v573 = vmul.f32 %v447, %v559
      %v574 = vmul.f32 %v448, %v560
      %v575 = vmul.f32 %v449, %v561
      %v576 = vmul.f32 %v450, %v562
      %v577 = vmul.f32 %v451, %v563
      %v578 = vmul.f32 %v452, %v564
      %v579 = vmul.f32 %v453, %v565
      %v580 = vmul.f32 %v454, %v566
      %v581 = vmul.f32 %v455, %v567
      %v582 = vmul.f32 %v456, %v568
      %v583 = vmul.f32 %v457, %v569
      %v584 = vmul.f32 %v458, %v570
      %v585 = vmul.f32 %v459, %v571
      %v586 = vmul.f32 %v460, %v572
      %v587 = vsub.f32 0.0, %v405
      %v588 = vsub.f32 0.0, %v406
      %v589 = vsub.f32 0.0, %v407
      %v590 = vsub.f32 0.0, %v408
      %v591 = vsub.f32 0.0, %v409
      %v592 = vsub.f32 0.0, %v410
      %v593 = vsub.f32 0.0, %v411
      %v594 = vsub.f32 0.0, %v412
      %v595 = vsub.f32 0.0, %v413
      %v596 = vsub.f32 0.0, %v414
      %v597 = vsub.f32 0.0, %v415
      %v598 = vsub.f32 0.0, %v416
      %v599 = vsub.f32 0.0, %v417
      %v600 = vsub.f32 0.0, %v418
      %v601 = vmul.f32 %v587, %v405
      %v602 = vmul.f32 %v588, %v406
      %v603 = vmul.f32 %v589, %v407
      %v604 = vmul.f32 %v590, %v408
      %v605 = vmul.f32 %v591, %v409
      %v606 = vmul.f32 %v592, %v410
      %v607 = vmul.f32 %v593, %v411
      %v608 = vmul.f32 %v594, %v412
      %v609 = vmul.f32 %v595, %v413
      %v610 = vmul.f32 %v596, %v414
      %v611 = vmul.f32 %v597, %v415
      %v612 = vmul.f32 %v598, %v416
      %v613 = vmul.f32 %v599, %v417
      %v614 = vmul.f32 %v600, %v418
      %v615 = vmul.f32 %v601, 1.442695
      %v616 = vpow.pop %v615
      %v617 = vmul.f32 %v602, 1.442695
      %v618 = vpow.pop %v617
      %v619 = vmul.f32 %v603, 1.442695
      %v620 = vpow.pop %v619
      %v621 = vmul.f32 %v604, 1.442695
      %v622 = vpow.pop %v621
      %v623 = vmul.f32 %v605, 1.442695
      %v624 = vpow.pop %v623
      %v625 = vmul.f32 %v606, 1.442695
      %v626 = vpow.pop %v625
      %v627 = vmul.f32 %v607, 1.442695
      %v628 = vpow.pop %v627
      %v629 = vmul.f32 %v608, 1.442695
      %v630 = vpow.pop %v629
      %v631 = vmul.f32 %v609, 1.442695
      %v632 = vpow.pop %v631
      %v633 = vmul.f32 %v610, 1.442695
      %v634 = vpow.pop %v633
      %v635 = vmul.f32 %v611, 1.442695
      %v636 = vpow.pop %v635
      %v637 = vmul.f32 %v612, 1.442695
      %v638 = vpow.pop %v637
      %v639 = vmul.f32 %v613, 1.442695
      %v640 = vpow.pop %v639
      %v641 = vmul.f32 %v614, 1.442695
      %v642 = vpow.pop %v641
      %v643 = vmul.f32 %v573, %v616
      %v644 = vmul.f32 %v574, %v618
      %v645 = vmul.f32 %v575, %v620
      %v646 = vmul.f32 %v576, %v622
      %v647 = vmul.f32 %v577, %v624
      %v648 = vmul.f32 %v578, %v626
      %v649 = vmul.f32 %v579, %v628
      %v650 = vmul.f32 %v580, %v630
      %v651 = vmul.f32 %v581, %v632
      %v652 = vmul.f32 %v582, %v634
      %v653 = vmul.f32 %v583, %v636
      %v654 = vmul.f32 %v584, %v638
      %v655 = vmul.f32 %v585, %v640
      %v656 = vmul.f32 %v586, %v642
      %v657 = vsub.f32 1.0, %v643
      %v658 = vsub.f32 1.0, %v644
      %v659 = vsub.f32 1.0, %v645
      %v660 = vsub.f32 1.0, %v646
      %v661 = vsub.f32 1.0, %v647
      %v662 = vsub.f32 1.0, %v648
      %v663 = vsub.f32 1.0, %v649
      %v664 = vsub.f32 1.0, %v650
      %v665 = vsub.f32 1.0, %v651
      %v666 = vsub.f32 1.0, %v652
      %v667 = vsub.f32 1.0, %v653
      %v668 = vsub.f32 1.0, %v654
      %v669 = vsub.f32 1.0, %v655
      %v670 = vsub.f32 1.0, %v656
      %v671 = vmul.f32 %v391, %v657
      %v672 = vmul.f32 %v392, %v658
      %v673 = vmul.f32 %v393, %v659
      %v674 = vmul.f32 %v394, %v660
      %v675 = vmul.f32 %v395, %v661
      %v676 = vmul.f32 %v396, %v662
      %v677 = vmul.f32 %v397, %v663
      %v678 = vmul.f32 %v398, %v664
      %v679 = vmul.f32 %v399, %v665
      %v680 = vmul.f32 %v400, %v666
      %v681 = vmul.f32 %v401, %v667
      %v682 = vmul.f32 %v402, %v668
      %v683 = vmul.f32 %v403, %v669
      %v684 = vmul.f32 %v404, %v670
      %v685 = vadd.f32 %v671, 1.0
      %v686 = vadd.f32 %v672, 1.0
      %v687 = vadd.f32 %v673, 1.0
      %v688 = vadd.f32 %v674, 1.0
      %v689 = vadd.f32 %v675, 1.0
      %v690 = vadd.f32 %v676, 1.0
      %v691 = vadd.f32 %v677, 1.0
      %v692 = vadd.f32 %v678, 1.0
      %v693 = vadd.f32 %v679, 1.0
      %v694 = vadd.f32 %v680, 1.0
      %v695 = vadd.f32 %v681, 1.0
      %v696 = vadd.f32 %v682, 1.0
      %v697 = vadd.f32 %v683, 1.0
      %v698 = vadd.f32 %v684, 1.0
      %v699 = vmul.f32 %v349, %v685
      %v700 = vmul.f32 %v350, %v686
      %v701 = vmul.f32 %v351, %v687
      %v702 = vmul.f32 %v352, %v688
      %v703 = vmul.f32 %v353, %v689
      %v704 = vmul.f32 %v354, %v690
      %v705 = vmul.f32 %v355, %v691
      %v706 = vmul.f32 %v356, %v692
      %v707 = vmul.f32 %v357, %v693
      %v708 = vmul.f32 %v358, %v694
      %v709 = vmul.f32 %v359, %v695
      %v710 = vmul.f32 %v360, %v696
      %v711 = vmul.f32 %v361, %v697
      %v712 = vmul.f32 %v362, %v698
      %v713 = vld [vmem:[%s3] sm:$0xff]
      %v714 = vld [vmem:[%s3 + $0x8] sm:$0xff]
      %v715 = vld [vmem:[%s3 + $0x10] sm:$0xff]
      %v716 = vld [vmem:[%s3 + $0x18] sm:$0xff]
      %v717 = vld [vmem:[%s3 + $0x20] sm:$0xff]
      %v718 = vld [vmem:[%s3 + $0x28] sm:$0xff]
      %v719 = vld [vmem:[%s3 + $0x30] sm:$0xff]
      %v720 = vld [vmem:[%s3 + $0x38] sm:$0xff]
      %v721 = vld [vmem:[%s3 + $0x40] sm:$0xff]
      %v722 = vld [vmem:[%s3 + $0x48] sm:$0xff]
      %v723 = vld [vmem:[%s3 + $0x50] sm:$0xff]
      %v724 = vld [vmem:[%s3 + $0x58] sm:$0xff]
      %v725 = vld [vmem:[%s3 + $0x60] sm:$0xff]
      %v726 = vld [vmem:[%s3 + $0x68] sm:$0xff]
      %v727 = vld [vmem:[%s3 + $0x70] sm:$0xff]
      %v728 = vld [vmem:[%s3 + $0x78] sm:$0xff]
      %v729 = vld [vmem:[%s3 + $0x80] sm:$0xff]
      %v730 = vld [vmem:[%s3 + $0x88] sm:$0xff]
      %v731 = vld [vmem:[%s3 + $0x90] sm:$0xff]
      %v732 = vld [vmem:[%s3 + $0x98] sm:$0xff]
      %v733 = vld [vmem:[%s3 + $0xa0] sm:$0xff]
      %v734 = vld [vmem:[%s3 + $0xa8] sm:$0xff]
      %v735 = vld [vmem:[%s3 + $0xb0] sm:$0xff]
      %v736 = vld [vmem:[%s3 + $0xb8] sm:$0xff]
      %v737 = vld [vmem:[%s3 + $0xc0] sm:$0xff]
      %v738 = vld [vmem:[%s3 + $0xc8] sm:$0xff]
      %v739 = vld [vmem:[%s3 + $0xd0] sm:$0xff]
      %v740 = vld [vmem:[%s3 + $0xd8] sm:$0xff]
      %v741 = vld [vmem:[%s3 + $0xe0] sm:$0xff]
      %v742 = vld [vmem:[%s3 + $0xe8] sm:$0xff]
      %v743 = vld [vmem:[%s3 + $0xf0] sm:$0xff]
      %v744 = vld [vmem:[%s3 + $0xf8] sm:$0xff]
      %v745 = vld [vmem:[%s4] sm:$0x1]
      %v747 = vperm.slane %v745, 0
      %749 = vmatpush.msra.mxu0 %v728
      %750 = vmatpush.msra.mxu0 %v727
      %751 = vmatpush.msra.mxu0 %v726
      %752 = vmatpush.msra.mxu0 %v725
      %753 = vmatpush.msra.mxu0 %v724
      %754 = vmatpush.msra.mxu0 %v723
      %755 = vmatpush.msra.mxu0 %v722
      %756 = vmatpush.msra.mxu0 %v721
      %757 = vmatpush.msra.mxu0 %v720
      %758 = vmatpush.msra.mxu0 %v719
      %759 = vmatpush.msra.mxu0 %v718
      %760 = vmatpush.msra.mxu0 %v717
      %761 = vmatpush.msra.mxu0 %v716
      %762 = vmatpush.msra.mxu0 %v715
      %763 = vmatpush.msra.mxu0 %v714
      %764 = vmatpush.msra.mxu0 %v713
      %765 = vmatmul.f32.gmra.mxu0 %v699
      %v766 = vpop.f32.mrf.mxu0
      %v767 = vadd.f32 %v747, %v766
      %768 = vmatmul.f32.gmra.mxu0 %v701
      %v769 = vpop.f32.mrf.mxu0
      %v770 = vadd.f32 %v747, %v769
      %771 = vmatmul.f32.gmra.mxu0 %v703
      %v772 = vpop.f32.mrf.mxu0
      %v773 = vadd.f32 %v747, %v772
      %774 = vmatmul.f32.gmra.mxu0 %v705
      %v775 = vpop.f32.mrf.mxu0
      %v776 = vadd.f32 %v747, %v775
      %777 = vmatmul.f32.gmra.mxu0 %v707
      %v778 = vpop.f32.mrf.mxu0
      %v779 = vadd.f32 %v747, %v778
      %780 = vmatmul.f32.gmra.mxu0 %v709
      %v781 = vpop.f32.mrf.mxu0
      %v782 = vadd.f32 %v747, %v781
      %783 = vmatmul.f32.gmra.mxu0 %v711
      %v784 = vpop.f32.mrf.mxu0
      %v785 = vadd.f32 %v747, %v784
      %786 = vdwg.mxu0
      %787 = vmatpush.msra.mxu0 %v744
      %788 = vmatpush.msra.mxu0 %v743
      %789 = vmatpush.msra.mxu0 %v742
      %790 = vmatpush.msra.mxu0 %v741
      %791 = vmatpush.msra.mxu0 %v740
      %792 = vmatpush.msra.mxu0 %v739
      %793 = vmatpush.msra.mxu0 %v738
      %794 = vmatpush.msra.mxu0 %v737
      %795 = vmatpush.msra.mxu0 %v736
      %796 = vmatpush.msra.mxu0 %v735
      %797 = vmatpush.msra.mxu0 %v734
      %798 = vmatpush.msra.mxu0 %v733
      %799 = vmatpush.msra.mxu0 %v732
      %800 = vmatpush.msra.mxu0 %v731
      %801 = vmatpush.msra.mxu0 %v730
      %802 = vmatpush.msra.mxu0 %v729
      %803 = vmatmul.f32.gmra.mxu0 %v700
      %v804 = vpop.f32.mrf.mxu0
      %v805 = vadd.f32 %v767, %v804
      %806 = vmatmul.f32.gmra.mxu0 %v702
      %v807 = vpop.f32.mrf.mxu0
      %v808 = vadd.f32 %v770, %v807
      %809 = vmatmul.f32.gmra.mxu0 %v704
      %v810 = vpop.f32.mrf.mxu0
      %v811 = vadd.f32 %v773, %v810
      %812 = vmatmul.f32.gmra.mxu0 %v706
      %v813 = vpop.f32.mrf.mxu0
      %v814 = vadd.f32 %v776, %v813
      %815 = vmatmul.f32.gmra.mxu0 %v708
      %v816 = vpop.f32.mrf.mxu0
      %v817 = vadd.f32 %v779, %v816
      %818 = vmatmul.f32.gmra.mxu0 %v710
      %v819 = vpop.f32.mrf.mxu0
      %v820 = vadd.f32 %v782, %v819
      %821 = vmatmul.f32.gmra.mxu0 %v712
      %v822 = vpop.f32.mrf.mxu0
      %v823 = vadd.f32 %v785, %v822
      %824 = vdwg.mxu0
      %825 = vst [vmem:[%s226] sm:$0xff] %v805
      %826 = vst [vmem:[%s226 + $0x8] sm:$0xff] %v808
      %827 = vst [vmem:[%s226 + $0x10] sm:$0xff] %v811
      %828 = vst [vmem:[%s226 + $0x18] sm:$0xff] %v814
      %829 = vst [vmem:[%s226 + $0x20] sm:$0xff] %v817
      %830 = vst [vmem:[%s226 + $0x28] sm:$0xff] %v820
      %831 = vst [vmem:[%s226 + $0x30] sm:$0xff] %v823
      %s832 = smul.u32 7, %s16
      %p833 = scmp.lt.s32.totalorder %s832, 13
      %s834 = scalar_select %p833, %s832, 13
      %s835 = smul.addr %s834, 8
      %s836 = scalar_lea.vmem %s5, %s835
      // Predicated region
      $region41: #{forward.1} parent=39 // pred_check
        %p837 = pneg %p144
      $region42: #{forward.1} parent=39 // pred_check_branch
        %839 = sbr.rel (%p837) target = $region44
      $region43: #{forward.1} parent=39 // pred_region
        %s840 = smul.u32 7, %s16
      $region44: #{forward.1} parent=39 // pred_fallthru
        _
    $region40: #{forward.1} parent=5 // pred_fallthru
      _
    %p841 = scmp.le.s32.totalorder 2, %s11
    // Predicated region
    $region45: #{forward.1} parent=5 // pred_check
      %p842 = pneg %p841
    $region46: #{forward.1} parent=5 // pred_check_branch
      %844 = sbr.rel (%p842) target = $region48
    $region47: #{forward.1} parent=5 // pred_region
      %s845 = ssub.s32 %s11, 2
      // Predicated region
      $region49: #{forward.1} parent=47 // pred_check
        %p846 = pneg %p150
      $region50: #{forward.1} parent=47 // pred_check_branch
        %848 = sbr.rel (%p846) target = $region52
      $region51: #{forward.1} parent=47 // pred_region
        %s849 = smul.u32 7, %s17
        %p850 = scmp.lt.s32.totalorder %s849, 13
        %s851 = scalar_select %p850, %s849, 13
        %s852 = smul.addr %s851, 8
        %s853 = scalar_lea.vmem %s5, %s852
      $region52: #{forward.1} parent=47 // pred_fallthru
        _
    $region48: #{forward.1} parent=5 // pred_fallthru
      _
  $region6: #{forward.1} parent=0 // loop_footer
    %s15 = sadd.s32 1, %s11
  $region7: #{forward.1} parent=0 // loop_footer_branch
    %10 = sbr.rel target = $region3
  $region8: #{forward.1} parent=0 // loop_exit
    _

</llo_original>
